<compile_context>
chip_gen: v7x
topology: tpu7x:2x2x1
jax: 0.10.0
libtpu: 0.0.40
codegen_flags: <defaults>
</compile_context>

<pallas_src>
import jax
import jax.numpy as jnp
from jax.experimental import pallas as pl
from jax.experimental.pallas import tpu as pltpu


def _round_up(x, m):
    return (x + m - 1) // m * m


def _has_two_tensorcores():
    """v7x has 2 TensorCores per chip; v5e/v6e have 1."""
    try:
        kind = jax.devices()[0].device_kind.lower()
    except Exception:
        return False
    return "v7" in kind


def _choose_tiling(B, *, batch_tile, multi_tc):
    """Pick (batch_tile TB, padded batch B_pad).

    Single-TC chips: one big grid step (the grid is a serial loop; more steps
    just add per-step overhead).  Two-TC chips (v7x): >= 2 balanced 'parallel'
    steps of >= 256 rows each, but never split tiny batches.
    """
    B8 = _round_up(B, 8)
    if not multi_tc:
        if B8 <= 2048:
            return B8, B8
        TB = batch_tile
    else:
        if B8 < 512:          # too small to split usefully across 2 TCs
            return B8, B8
        TB = max(256, min(batch_tile, _round_up(pl.cdiv(B8, 2), 8)))
    B_pad = _round_up(B8, TB)
    return TB, B_pad


def _mlp_kernel(x_ref, w1_ref, w2_ref, w34_ref, b_ref, o_ref):
    # Packed f32 bias row; static, lane-aligned slices (offsets 0/256/384/512).
    b1 = b_ref[:, 0:256]
    b2 = b_ref[:, 256:384]
    b3 = b_ref[:, 384:512]
    b4 = b_ref[:, 512:]

    # Layer 1: [TB, F] @ [F, 256] + b1 -> ReLU   (bf16 in, f32 accumulate)
    h = x_ref[...].astype(jnp.bfloat16)
    h = jnp.dot(h, w1_ref[...], preferred_element_type=jnp.float32)
    h = jnp.maximum(h + b1, 0.0).astype(jnp.bfloat16)
    # Layer 2: [TB, 256] @ [256, 128] + b2 -> ReLU
    h = jnp.dot(h, w2_ref[...], preferred_element_type=jnp.float32)
    h = jnp.maximum(h + b2, 0.0).astype(jnp.bfloat16)
    # Layer 3: [TB, 128] @ [128, 128] + b3 -> ReLU (64-wide layer padded to 128)
    h = jnp.dot(h, w34_ref[:, 0:128], preferred_element_type=jnp.float32)
    h = jnp.maximum(h + b3, 0.0).astype(jnp.bfloat16)
    # Layer 4 (no activation): [TB, 128] @ [128, NOUT] + b4 (lane-dense store)
    out = jnp.dot(h, w34_ref[:, 128:], preferred_element_type=jnp.float32)
    o_ref[...] = (out + b4).astype(o_ref.dtype)


def prepare_params(params):
    """One-time preprocessing: bf16 casts, lane padding, ref packing.

    params: dict name -> (w [in, out] f32, b [1, out] f32), transposed vs
    PyTorch's nn.Linear [out, in] storage.
    """
    (w1, b1), (w2, b2), (w3, b3), (w4, b4) = (
        params["fc_first"], params["fc_hidden_1"],
        params["fc_hidden_2"], params["fc_last"])
    F_in = w1.shape[0]
    A = w4.shape[1]
    NOUT = max(128, _round_up(A, 128))   # lane-dense output width
    H3 = 128                             # 64-wide hidden layer padded to 128

    # Layer 3: pad out-dim 64 -> 128 (zero cols + zero bias -> ReLU keeps 0).
    w3p = jnp.zeros((w3.shape[0], H3), w3.dtype).at[:, :w3.shape[1]].set(w3)
    b3p = jnp.zeros((1, H3), b3.dtype).at[:, :b3.shape[1]].set(b3)
    # Layer 4: pad in-dim 64 -> 128 (zero rows contribute nothing) and
    # out-dim A -> NOUT so the output store is an unmasked lane-dense vst.
    w4p = jnp.zeros((H3, NOUT), w4.dtype).at[:w4.shape[0], :A].set(w4)
    b4p = jnp.zeros((1, NOUT), b4.dtype).at[:, :A].set(b4)

    prep = {
        "w1": w1.astype(jnp.bfloat16),                                # [F, 256]
        "w2": w2.astype(jnp.bfloat16),                                # [256,128]
        "w34": jnp.concatenate([w3p, w4p], 1).astype(jnp.bfloat16),   # [128,128+NOUT]
        "bias": jnp.concatenate([b1, b2, b3p, b4p], 1).astype(jnp.float32),
        "in_size": F_in,
        "out_size": A,
        "nout": NOUT,
    }
    # Force materialization now so the hot path does zero conversions.
    for k in ("w1", "w2", "w34", "bias"):
        prep[k] = jax.block_until_ready(prep[k])
    return prep


def atari_model_forward(x, prep, *, batch_tile=512):
    """Fused forward pass.

    x: [B, input_size] (f32 or bf16 -- bf16 input halves the dominant HBM
    stream; the in-kernel cast is then a no-op).
    Returns the PADDED output [B_pad, NOUT]; index [:B, :prep['out_size']]
    lazily in the consumer (avoids an extra XLA copy on the hot path).
    """
    B, F_in = x.shape
    assert F_in == prep["in_size"], "input feature size mismatch"
    NOUT = prep["nout"]
    w1, w2, w34, bias = prep["w1"], prep["w2"], prep["w34"], prep["bias"]

    TB, B_pad = _choose_tiling(B, batch_tile=batch_tile,
                               multi_tc=_has_two_tensorcores())
    if B_pad != B:
        x = jnp.pad(x, ((0, B_pad - B), (0, 0)))
    grid = B_pad // TB

    def full_block(arr):
        # weights / packed biases: one full block, identical every grid step
        return pl.BlockSpec(arr.shape, lambda i: (0,) * arr.ndim)

    xbytes = jnp.dtype(x.dtype).itemsize
    flops = 2 * B_pad * (F_in * 256 + 256 * 128 + 128 * 128 + 128 * NOUT)
    bytes_accessed = ((w1.size + w2.size + w34.size) * 2      # bf16 weights
                      + bias.size * 4                         # f32 biases
                      + B_pad * F_in * xbytes                 # activations in
                      + B_pad * NOUT * 4)                     # f32 output

    return pl.pallas_call(
        _mlp_kernel,
        out_shape=jax.ShapeDtypeStruct((B_pad, NOUT), jnp.float32),
        grid=(grid,),
        in_specs=[
            pl.BlockSpec((TB, F_in), lambda i: (i, 0)),       # x: batch-tiled
            full_block(w1), full_block(w2), full_block(w34), full_block(bias),
        ],
        out_specs=pl.BlockSpec((TB, NOUT), lambda i: (i, 0)),
        compiler_params=pltpu.CompilerParams(
            dimension_semantics=("parallel",)),
        cost_estimate=pl.CostEstimate(
            flops=flops, transcendentals=0, bytes_accessed=bytes_accessed),
    )(x, w1, w2, w34, bias)


def init_params(key, input_size, output_size):
    """Deterministic synthetic init (shapes match the nn.Linear layers)."""
    dims = [(input_size, 256), (256, 128), (128, 64), (64, output_size)]
    names = ["fc_first", "fc_hidden_1", "fc_hidden_2", "fc_last"]
    params = {}
    for name, (fin, fout) in zip(names, dims):
        key, kw, kb = jax.random.split(key, 3)
        bound = 1.0 / jnp.sqrt(fin)
        # stored as [in, out] (transposed vs PyTorch's [out, in])
        w = jax.random.uniform(kw, (fin, fout), jnp.float32, -bound, bound)
        b = jax.random.uniform(kb, (1, fout), jnp.float32, -bound, bound)
        params[name] = (w, b)
    return params


def reference_forward(x, params):
    """Pure-JAX f32 reference matching the PyTorch module."""
    h = x
    for name in ["fc_first", "fc_hidden_1", "fc_hidden_2"]:
        w, b = params[name]
        h = jnp.maximum(h @ w + b, 0.0)
    w, b = params["fc_last"]
    out = h @ w + b
    return out.reshape(out.shape[0], -1)  # mirrors x.view(x.size(0), -1)


if __name__ == "__main__":
    key = jax.random.PRNGKey(0)
    k_x, k_p = jax.random.split(key)

    batch = 32         # small example batch
    input_size = 128   # Atari RAM observation size
    output_size = 6    # e.g. Pong action space (exercises lane padding)

    x = jax.random.normal(k_x, (batch, input_size), jnp.float32)
    params = init_params(k_p, input_size, output_size)

    # One-time preprocessing (hoisted out of the hot path).
    prep = prepare_params(params)

    out_padded = jax.block_until_ready(atari_model_forward(x, prep))
    assert out_padded.shape[0] >= batch and out_padded.shape[1] >= output_size
    # For verification only: strip batch/lane padding (consumers should do
    # this lazily or fuse e.g. an argmax over the first `output_size` lanes).
    out = out_padded[:batch, :output_size]

    ref = reference_forward(x, params)
    assert out.shape == (batch, output_size)
    # bf16 matmul inputs with f32 accumulation -> loosened tolerance vs f32 ref.
    assert jnp.allclose(out, ref, atol=3e-2, rtol=3e-2), "mismatch vs reference"

    print("KERNEL_OK")
</pallas_src>

<mosaic_0001>
module attributes {stable_mosaic.version = 11 : i64} {
  func.func @_mlp_kernel(%arg0: i32, %arg1: memref<32x128xf32, #tpu.memory_space<vmem>>, %arg2: memref<128x256xbf16, #tpu.memory_space<vmem>>, %arg3: memref<256x128xbf16, #tpu.memory_space<vmem>>, %arg4: memref<128x256xbf16, #tpu.memory_space<vmem>>, %arg5: memref<1x640xf32, #tpu.memory_space<vmem>>, %arg6: memref<32x128xf32, #tpu.memory_space<vmem>>) attributes {dimension_semantics = [#tpu.dimension_semantics<parallel>], iteration_bounds = array<i64: 1>, scalar_prefetch = 0 : i64, scratch_operands = 0 : i64, tpu.core_type = #tpu.core_type<tc>, window_params = [{transform_indices = @transform_0, window_bounds = array<i64: 32, 128>}, {pipeline_mode = #tpu.pipeline_mode<synchronous>, transform_indices = @transform_1, window_bounds = array<i64: 128, 256>}, {pipeline_mode = #tpu.pipeline_mode<synchronous>, transform_indices = @transform_2, window_bounds = array<i64: 256, 128>}, {pipeline_mode = #tpu.pipeline_mode<synchronous>, transform_indices = @transform_3, window_bounds = array<i64: 128, 256>}, {pipeline_mode = #tpu.pipeline_mode<synchronous>, transform_indices = @transform_4, window_bounds = array<i64: 1, 640>}, {transform_indices = @transform_5, window_bounds = array<i64: 32, 128>}]} {
    %c0 = arith.constant 0 : index
    %c0_0 = arith.constant 0 : index
    %0 = vector.load %arg5[%c0, %c0_0] : memref<1x640xf32, #tpu.memory_space<vmem>>, vector<1x256xf32>
    %c0_1 = arith.constant 0 : index
    %c256 = arith.constant 256 : index
    %1 = vector.load %arg5[%c0_1, %c256] : memref<1x640xf32, #tpu.memory_space<vmem>>, vector<1x128xf32>
    %c0_2 = arith.constant 0 : index
    %c384 = arith.constant 384 : index
    %2 = vector.load %arg5[%c0_2, %c384] : memref<1x640xf32, #tpu.memory_space<vmem>>, vector<1x128xf32>
    %c0_3 = arith.constant 0 : index
    %c512 = arith.constant 512 : index
    %3 = vector.load %arg5[%c0_3, %c512] : memref<1x640xf32, #tpu.memory_space<vmem>>, vector<1x128xf32>
    %c0_4 = arith.constant 0 : index
    %c0_5 = arith.constant 0 : index
    %4 = vector.load %arg1[%c0_4, %c0_5] : memref<32x128xf32, #tpu.memory_space<vmem>>, vector<32x128xf32>
    %5 = arith.truncf %4 : vector<32x128xf32> to vector<32x128xbf16>
    %c0_6 = arith.constant 0 : index
    %c0_7 = arith.constant 0 : index
    %6 = vector.load %arg2[%c0_6, %c0_7] : memref<128x256xbf16, #tpu.memory_space<vmem>>, vector<128x256xbf16>
    %cst = arith.constant dense<0.000000e+00> : vector<32x256xf32>
    %7 = tpu.matmul %5, %6, %cst {dimension_numbers = #tpu.dot_dimension_numbers<[1], [0], [0], [1], [0, 0, 1, 1], [], []>} : vector<32x128xbf16>, vector<128x256xbf16>, vector<32x256xf32> -> vector<32x256xf32>
    %8 = vector.broadcast %0 : vector<1x256xf32> to vector<32x256xf32>
    %9 = arith.addf %7, %8 : vector<32x256xf32>
    %cst_8 = arith.constant 0.000000e+00 : f32
    %10 = vector.broadcast %cst_8 : f32 to vector<32x256xf32>
    %11 = arith.maximumf %9, %10 : vector<32x256xf32>
    %12 = arith.truncf %11 : vector<32x256xf32> to vector<32x256xbf16>
    %c0_9 = arith.constant 0 : index
    %c0_10 = arith.constant 0 : index
    %13 = vector.load %arg3[%c0_9, %c0_10] : memref<256x128xbf16, #tpu.memory_space<vmem>>, vector<256x128xbf16>
    %cst_11 = arith.constant dense<0.000000e+00> : vector<32x128xf32>
    %14 = tpu.matmul %12, %13, %cst_11 {dimension_numbers = #tpu.dot_dimension_numbers<[1], [0], [0], [1], [0, 0, 1, 1], [], []>} : vector<32x256xbf16>, vector<256x128xbf16>, vector<32x128xf32> -> vector<32x128xf32>
    %15 = vector.broadcast %1 : vector<1x128xf32> to vector<32x128xf32>
    %16 = arith.addf %14, %15 : vector<32x128xf32>
    %cst_12 = arith.constant 0.000000e+00 : f32
    %17 = vector.broadcast %cst_12 : f32 to vector<32x128xf32>
    %18 = arith.maximumf %16, %17 : vector<32x128xf32>
    %19 = arith.truncf %18 : vector<32x128xf32> to vector<32x128xbf16>
    %c0_13 = arith.constant 0 : index
    %c0_14 = arith.constant 0 : index
    %20 = vector.load %arg4[%c0_13, %c0_14] : memref<128x256xbf16, #tpu.memory_space<vmem>>, vector<128x128xbf16>
    %cst_15 = arith.constant dense<0.000000e+00> : vector<32x128xf32>
    %21 = tpu.matmul %19, %20, %cst_15 {dimension_numbers = #tpu.dot_dimension_numbers<[1], [0], [0], [1], [0, 0, 1, 1], [], []>} : vector<32x128xbf16>, vector<128x128xbf16>, vector<32x128xf32> -> vector<32x128xf32>
    %22 = vector.broadcast %2 : vector<1x128xf32> to vector<32x128xf32>
    %23 = arith.addf %21, %22 : vector<32x128xf32>
    %cst_16 = arith.constant 0.000000e+00 : f32
    %24 = vector.broadcast %cst_16 : f32 to vector<32x128xf32>
    %25 = arith.maximumf %23, %24 : vector<32x128xf32>
    %26 = arith.truncf %25 : vector<32x128xf32> to vector<32x128xbf16>
    %c0_17 = arith.constant 0 : index
    %c128 = arith.constant 128 : index
    %27 = vector.load %arg4[%c0_17, %c128] : memref<128x256xbf16, #tpu.memory_space<vmem>>, vector<128x128xbf16>
    %cst_18 = arith.constant dense<0.000000e+00> : vector<32x128xf32>
    %28 = tpu.matmul %26, %27, %cst_18 {dimension_numbers = #tpu.dot_dimension_numbers<[1], [0], [0], [1], [0, 0, 1, 1], [], []>} : vector<32x128xbf16>, vector<128x128xbf16>, vector<32x128xf32> -> vector<32x128xf32>
    %29 = vector.broadcast %3 : vector<1x128xf32> to vector<32x128xf32>
    %30 = arith.addf %28, %29 : vector<32x128xf32>
    %c0_19 = arith.constant 0 : index
    %c0_20 = arith.constant 0 : index
    %31 = vector.load %arg6[%c0_19, %c0_20] : memref<32x128xf32, #tpu.memory_space<vmem>>, vector<32x128xf32>
    tpu.vector_store %arg6[%c0_19, %c0_20], %30 {strides = array<i32>} : memref<32x128xf32, #tpu.memory_space<vmem>>, vector<32x128xf32>,
    return
  }
  func.func @transform_0(%arg0: i32) -> (i32, i32) {
    %c0_i32 = arith.constant 0 : i32
    %c0_i32_0 = arith.constant 0 : i32
    return %arg0, %c0_i32 : i32, i32
  }
  func.func @transform_1(%arg0: i32) -> (i32, i32) {
    %c0_i32 = arith.constant 0 : i32
    %c0_i32_0 = arith.constant 0 : i32
    %c0_i32_1 = arith.constant 0 : i32
    return %c0_i32, %c0_i32_0 : i32, i32
  }
  func.func @transform_2(%arg0: i32) -> (i32, i32) {
    %c0_i32 = arith.constant 0 : i32
    %c0_i32_0 = arith.constant 0 : i32
    %c0_i32_1 = arith.constant 0 : i32
    return %c0_i32, %c0_i32_0 : i32, i32
  }
  func.func @transform_3(%arg0: i32) -> (i32, i32) {
    %c0_i32 = arith.constant 0 : i32
    %c0_i32_0 = arith.constant 0 : i32
    %c0_i32_1 = arith.constant 0 : i32
    return %c0_i32, %c0_i32_0 : i32, i32
  }
  func.func @transform_4(%arg0: i32) -> (i32, i32) {
    %c0_i32 = arith.constant 0 : i32
    %c0_i32_0 = arith.constant 0 : i32
    %c0_i32_1 = arith.constant 0 : i32
    return %c0_i32, %c0_i32_0 : i32, i32
  }
  func.func @transform_5(%arg0: i32) -> (i32, i32) {
    %c0_i32 = arith.constant 0 : i32
    %c0_i32_0 = arith.constant 0 : i32
    return %arg0, %c0_i32 : i32, i32
  }
}

</mosaic_0001>

<llo_original>
// kernel: tpu_custom_call.1
$region0: #{tpu_custom_call.1}
  #allocation0 [shape = 'u32[]', space=smem, size = 0x4, offset = 0x4, fixed_abs, tag = 'smem constant byte address 0x4 - core index']
  #allocation1 [shape = 'u32[144,128]{1,0:T(1,128)}', space=vmem, size = 0x12000, scoped, tag = 'internal scratch']
  %s0 = inlined_call_operand.hbm [shape: f32[32,128], index: 0, kind: input, shape index: {}]
  %s1 = inlined_call_operand.hbm [shape: bf16[128,256], index: 1, kind: input, shape index: {}]
  %s2 = inlined_call_operand.hbm [shape: bf16[256,128], index: 2, kind: input, shape index: {}]
  %s3 = inlined_call_operand.hbm [shape: bf16[128,256], index: 3, kind: input, shape index: {}]
  %s4 = inlined_call_operand.vmem [shape: f32[1,640], index: 4, kind: input, shape index: {}]
  %s5 = inlined_call_operand.hbm [shape: f32[32,128], index: 5, kind: output, shape index: {}]
  %s6 = sld [smem:[#allocation0]]
  $region46: #{tpu_custom_call.1} parent=0
    _
  %s8 = ssub.s32 1, %s6
  %s9 = scalar_select 0, %s8, %s6
  $region1: #{tpu_custom_call.1} parent=0
    #allocation2 [shape = 'u8[16384]{0}', space=vmem, size = 0x4000, scoped, tag = 'input window, operand 0, single buffered']
    #allocation3 [shape = 's32[1]{0}', space=sflag, size = 0x4, scoped, tag = 'scoped memory for tpu_custom_call.1']
    #allocation4 [shape = 's32[1]{0}', space=sflag, size = 0x4, scoped, tag = 'scoped memory for tpu_custom_call.1']
    #allocation5 [shape = 'u8[65536]{0}', space=vmem, size = 0x10000, scoped, tag = 'input window, operand 1, single buffered']
    #allocation6 [shape = 's32[1]{0}', space=sflag, size = 0x4, scoped, tag = 'scoped memory for tpu_custom_call.1']
    #allocation7 [shape = 'u8[65536]{0}', space=vmem, size = 0x10000, scoped, tag = 'input window, operand 2, single buffered']
    #allocation8 [shape = 'u8[65536]{0}', space=vmem, size = 0x10000, scoped, tag = 'input window, operand 3, single buffered']
    #allocation9 [shape = 's32[1]{0}', space=sflag, size = 0x4, scoped, tag = 'scoped memory for tpu_custom_call.1']
    #allocation10 [shape = 'u8[16384]{0}', space=vmem, size = 0x4000, scoped, tag = 'output window, operand 0, single buffered']
    %10 = vsyncpa [#allocation3], 0
    %11 = vsyncpa [#allocation6], 0
    %12 = vsyncpa [#allocation9], 0
    %13 = vsyncpa [#allocation4], 0
    // Predicated region
    $region2: #{tpu_custom_call.1} parent=1 // pred_check
      _
    $region3: #{tpu_custom_call.1} parent=1 // pred_check_branch
      %15 = sbr.rel (0) target = $region5
    $region4: #{tpu_custom_call.1} parent=1 // pred_region
      %s17 = ssub.s32 512, 512
      %18 = vsyncadd [#allocation3], %s17
      %s19 = sshll.u32 [#allocation2], 4
      %s20 = int_to_ptr.vmem [resolvable:$true] %s19
      %25 = dma.hbm_to_vmem [thread:$0]  %s0, 512, %s20, [#allocation3], 128, 128, 8
    $region5: #{tpu_custom_call.1} parent=1 // pred_fallthru
      _
    // Predicated region
    $region6: #{tpu_custom_call.1} parent=1 // pred_check
      _
    $region7: #{tpu_custom_call.1} parent=1 // pred_check_branch
      %27 = sbr.rel (0) target = $region9
    $region8: #{tpu_custom_call.1} parent=1 // pred_region
      %s29 = ssub.s32 2048, 2048
      %30 = vsyncadd [#allocation6], %s29
      %s31 = sshll.u32 [#allocation5], 4
      %s32 = int_to_ptr.vmem [resolvable:$true] %s31
      %37 = dma.hbm_to_vmem [thread:$0]  %s1, 2048, %s32, [#allocation6], 128, 128, 8
    $region9: #{tpu_custom_call.1} parent=1 // pred_fallthru
      _
    // Predicated region
    $region10: #{tpu_custom_call.1} parent=1 // pred_check
      _
    $region11: #{tpu_custom_call.1} parent=1 // pred_check_branch
      %39 = sbr.rel (0) target = $region13
    $region12: #{tpu_custom_call.1} parent=1 // pred_region
      %s41 = ssub.s32 2048, 2048
      %42 = vsyncadd [#allocation6], %s41
      %s43 = sshll.u32 [#allocation7], 4
      %s44 = int_to_ptr.vmem [resolvable:$true] %s43
      %49 = dma.hbm_to_vmem [thread:$0]  %s2, 2048, %s44, [#allocation6], 64, 64, 4
    $region13: #{tpu_custom_call.1} parent=1 // pred_fallthru
      _
    // Predicated region
    $region14: #{tpu_custom_call.1} parent=1 // pred_check
      _
    $region15: #{tpu_custom_call.1} parent=1 // pred_check_branch
      %51 = sbr.rel (0) target = $region17
    $region16: #{tpu_custom_call.1} parent=1 // pred_region
      %s53 = ssub.s32 2048, 2048
      %54 = vsyncadd [#allocation9], %s53
      %s55 = sshll.u32 [#allocation8], 4
      %s56 = int_to_ptr.vmem [resolvable:$true] %s55
      %61 = dma.hbm_to_vmem [thread:$0]  %s3, 2048, %s56, [#allocation9], 128, 128, 8
    $region17: #{tpu_custom_call.1} parent=1 // pred_fallthru
      _
    // Predicated region
    $region18: #{tpu_custom_call.1} parent=1 // pred_check
      _
    $region19: #{tpu_custom_call.1} parent=1 // pred_check_branch
      %63 = sbr.rel (0) target = $region21
    $region20: #{tpu_custom_call.1} parent=1 // pred_region
      _
    $region21: #{tpu_custom_call.1} parent=1 // pred_fallthru
      _
    // Predicated region
    $region22: #{tpu_custom_call.1} parent=1 // pred_check
      _
    $region23: #{tpu_custom_call.1} parent=1 // pred_check_branch
      %65 = sbr.rel (0) target = $region25
    $region24: #{tpu_custom_call.1} parent=1 // pred_region
      %66 = dma.done [#allocation3], 512
    $region25: #{tpu_custom_call.1} parent=1 // pred_fallthru
      _
    // Predicated region
    $region26: #{tpu_custom_call.1} parent=1 // pred_check
      _
    $region27: #{tpu_custom_call.1} parent=1 // pred_check_branch
      %68 = sbr.rel (0) target = $region29
    $region28: #{tpu_custom_call.1} parent=1 // pred_region
      %69 = dma.done [#allocation6], 2048
    $region29: #{tpu_custom_call.1} parent=1 // pred_fallthru
      _
    // Predicated region
    $region30: #{tpu_custom_call.1} parent=1 // pred_check
      _
    $region31: #{tpu_custom_call.1} parent=1 // pred_check_branch
      %71 = sbr.rel (0) target = $region33
    $region32: #{tpu_custom_call.1} parent=1 // pred_region
      %72 = dma.done [#allocation6], 2048
    $region33: #{tpu_custom_call.1} parent=1 // pred_fallthru
      _
    // Predicated region
    $region34: #{tpu_custom_call.1} parent=1 // pred_check
      _
    $region35: #{tpu_custom_call.1} parent=1 // pred_check_branch
      %74 = sbr.rel (0) target = $region37
    $region36: #{tpu_custom_call.1} parent=1 // pred_region
      %75 = dma.done [#allocation9], 2048
    $region37: #{tpu_custom_call.1} parent=1 // pred_fallthru
      _
    %v77 = vld [vmem:[%s4] sm:$0x3]
    %v78 = vld [vmem:[%s4 + $0x2] sm:$0x1]
    %v79 = vld [vmem:[%s4 + $0x3] sm:$0x1]
    %v80 = vld [vmem:[%s4 + $0x4] sm:$0x1]
    %v81 = vld [vmem:[#allocation2] sm:$0xff]
    %v82 = vld [vmem:[#allocation2 + $0x8] sm:$0xff]
    %v83 = vld [vmem:[#allocation2 + $0x10] sm:$0xff]
    %v84 = vld [vmem:[#allocation2 + $0x18] sm:$0xff]
    %v85 = vpack.c.bf16 %v82, %v81
    %v86 = vpack.c.bf16 %v84, %v83
    %v87 = vld [vmem:[#allocation5] sm:$0xff]
    %v88 = vld [vmem:[#allocation5 + $0x8] sm:$0xff]
    %v89 = vld [vmem:[#allocation5 + $0x10] sm:$0xff]
    %v90 = vld [vmem:[#allocation5 + $0x18] sm:$0xff]
    %v91 = vld [vmem:[#allocation5 + $0x20] sm:$0xff]
    %v92 = vld [vmem:[#allocation5 + $0x28] sm:$0xff]
    %v93 = vld [vmem:[#allocation5 + $0x30] sm:$0xff]
    %v94 = vld [vmem:[#allocation5 + $0x38] sm:$0xff]
    %v95 = vld [vmem:[#allocation5 + $0x40] sm:$0xff]
    %v96 = vld [vmem:[#allocation5 + $0x48] sm:$0xff]
    %v97 = vld [vmem:[#allocation5 + $0x50] sm:$0xff]
    %v98 = vld [vmem:[#allocation5 + $0x58] sm:$0xff]
    %v99 = vld [vmem:[#allocation5 + $0x60] sm:$0xff]
    %v100 = vld [vmem:[#allocation5 + $0x68] sm:$0xff]
    %v101 = vld [vmem:[#allocation5 + $0x70] sm:$0xff]
    %v102 = vld [vmem:[#allocation5 + $0x78] sm:$0xff]
    %v104 = vlaneseq
    %v105 = vshrl.u32 %v104, 7
    %v106 = vsub.s32 0, %v105
    %v107 = vrot.slane %v77, %v106
    %v108 = vlaneseq
    %v109 = vshrl.u32 %v108, 7
    %v110 = vsub.s32 1, %v109
    %v111 = vrot.slane %v77, %v110
    %v130 = vunpack.c.l.b16 %v87
    %v131 = vunpack.c.h.b16 %v87
    %v132 = vunpack.c.l.b16 %v88
    %v133 = vunpack.c.h.b16 %v88
    %v134 = vunpack.c.l.b16 %v89
    %v135 = vunpack.c.h.b16 %v89
    %v136 = vunpack.c.l.b16 %v90
    %v137 = vunpack.c.h.b16 %v90
    %v138 = vunpack.c.l.b16 %v91
    %v139 = vunpack.c.h.b16 %v91
    %v140 = vunpack.c.l.b16 %v92
    %v141 = vunpack.c.h.b16 %v92
    %v142 = vunpack.c.l.b16 %v93
    %v143 = vunpack.c.h.b16 %v93
    %v144 = vunpack.c.l.b16 %v94
    %v145 = vunpack.c.h.b16 %v94
    %v146 = vunpack.c.l.b16 %v95
    %v147 = vunpack.c.h.b16 %v95
    %v148 = vunpack.c.l.b16 %v96
    %v149 = vunpack.c.h.b16 %v96
    %v150 = vunpack.c.l.b16 %v97
    %v151 = vunpack.c.h.b16 %v97
    %v152 = vunpack.c.l.b16 %v98
    %v153 = vunpack.c.h.b16 %v98
    %v154 = vunpack.c.l.b16 %v99
    %v155 = vunpack.c.h.b16 %v99
    %v156 = vunpack.c.l.b16 %v100
    %v157 = vunpack.c.h.b16 %v100
    %v158 = vunpack.c.l.b16 %v101
    %v159 = vunpack.c.h.b16 %v101
    %v160 = vunpack.c.l.b16 %v102
    %v161 = vunpack.c.h.b16 %v102
    %v162 = vpack.c.b16 %v132, %v130
    %v163 = vpack.c.b16 %v133, %v131
    %v164 = vpack.c.b16 %v136, %v134
    %v165 = vpack.c.b16 %v137, %v135
    %v166 = vpack.c.b16 %v140, %v138
    %v167 = vpack.c.b16 %v141, %v139
    %v168 = vpack.c.b16 %v144, %v142
    %v169 = vpack.c.b16 %v145, %v143
    %v170 = vpack.c.b16 %v148, %v146
    %v171 = vpack.c.b16 %v149, %v147
    %v172 = vpack.c.b16 %v152, %v150
    %v173 = vpack.c.b16 %v153, %v151
    %v174 = vpack.c.b16 %v156, %v154
    %v175 = vpack.c.b16 %v157, %v155
    %v176 = vpack.c.b16 %v160, %v158
    %v177 = vpack.c.b16 %v161, %v159
    %194 = vmatprep.subr.bf16.mxu0 %v163
    %195 = vmatpush1.bf16.msra.mxu0 %v162
    %196 = vmatprep.subr.bf16.mxu0 %v165
    %197 = vmatpush1.bf16.msra.mxu0 %v164
    %198 = vmatprep.subr.bf16.mxu0 %v167
    %199 = vmatpush1.bf16.msra.mxu0 %v166
    %200 = vmatprep.subr.bf16.mxu0 %v169
    %201 = vmatpush1.bf16.msra.mxu0 %v168
    %202 = vmatprep.subr.bf16.mxu0 %v171
    %203 = vmatpush1.bf16.msra.mxu0 %v170
    %204 = vmatprep.subr.bf16.mxu0 %v173
    %205 = vmatpush1.bf16.msra.mxu0 %v172
    %206 = vmatprep.subr.bf16.mxu0 %v175
    %207 = vmatpush1.bf16.msra.mxu0 %v174
    %208 = vmatprep.subr.bf16.mxu0 %v177
    %209 = vmatpush1.bf16.msra.mxu0 %v176
    %210 = vmatprep.subr.bf16.mxu0 0
    %211 = vmatpush1.bf16.msra.mxu0 0
    %212 = vmatprep.subr.bf16.mxu0 0
    %213 = vmatpush1.bf16.msra.mxu0 0
    %214 = vmatprep.subr.bf16.mxu0 0
    %215 = vmatpush1.bf16.msra.mxu0 0
    %216 = vmatprep.subr.bf16.mxu0 0
    %217 = vmatpush1.bf16.msra.mxu0 0
    %218 = vmatprep.subr.bf16.mxu0 0
    %219 = vmatpush1.bf16.msra.mxu0 0
    %220 = vmatprep.subr.bf16.mxu0 0
    %221 = vmatpush1.bf16.msra.mxu0 0
    %222 = vmatprep.subr.bf16.mxu0 0
    %223 = vmatpush1.bf16.msra.mxu0 0
    %224 = vmatprep.subr.bf16.mxu0 0
    %225 = vmatpush1.bf16.msra.mxu0 0
    %226 = vmatprep.mubr.bf16.mxu0 0
    %227 = vmatmul.mubr.bf16.gmra.mrb[0].mxu0 %v85
    %v228 = vpop.f32.mrb[0].mxu0
    %v229 = vadd.f32 %v107, %v228
    %v230 = vpop.f32.mrb[0].mxu0
    %v231 = vadd.f32 %v111, %v230
    %v232 = vpop.f32.mrb[0].mxu0
    %v233 = vadd.f32 %v107, %v232
    %v234 = vpop.f32.mrb[0].mxu0
    %v235 = vadd.f32 %v111, %v234
    %236 = vmatprep.mubr.bf16.mxu0 0
    %237 = vmatmul.mubr.bf16.gmra.mrb[0].mxu0 %v86
    %v238 = vpop.f32.mrb[0].mxu0
    %v239 = vadd.f32 %v107, %v238
    %v240 = vpop.f32.mrb[0].mxu0
    %v241 = vadd.f32 %v111, %v240
    %v242 = vpop.f32.mrb[0].mxu0
    %v243 = vadd.f32 %v107, %v242
    %v244 = vpop.f32.mrb[0].mxu0
    %v245 = vadd.f32 %v111, %v244
    %246 = vdwg.mxu0
    %v247 = vmax.f32 %v229, 0.0
    %v248 = vmax.f32 %v231, 0.0
    %v249 = vmax.f32 %v233, 0.0
    %v250 = vmax.f32 %v235, 0.0
    %v251 = vmax.f32 %v239, 0.0
    %v252 = vmax.f32 %v241, 0.0
    %v253 = vmax.f32 %v243, 0.0
    %v254 = vmax.f32 %v245, 0.0
    %v255 = vpack.c.bf16 %v249, %v247
    %v256 = vpack.c.bf16 %v250, %v248
    %v257 = vpack.c.bf16 %v253, %v251
    %v258 = vpack.c.bf16 %v254, %v252
    %v259 = vld [vmem:[#allocation7] sm:$0xf]
    %v260 = vld [vmem:[#allocation7 + $0x4] sm:$0xf]
    %v261 = vld [vmem:[#allocation7 + $0x8] sm:$0xf]
    %v262 = vld [vmem:[#allocation7 + $0xc] sm:$0xf]
    %v263 = vld [vmem:[#allocation7 + $0x10] sm:$0xf]
    %v264 = vld [vmem:[#allocation7 + $0x14] sm:$0xf]
    %v265 = vld [vmem:[#allocation7 + $0x18] sm:$0xf]
    %v266 = vld [vmem:[#allocation7 + $0x1c] sm:$0xf]
    %v267 = vld [vmem:[#allocation7 + $0x20] sm:$0xf]
    %v268 = vld [vmem:[#allocation7 + $0x24] sm:$0xf]
    %v269 = vld [vmem:[#allocation7 + $0x28] sm:$0xf]
    %v270 = vld [vmem:[#allocation7 + $0x2c] sm:$0xf]
    %v271 = vld [vmem:[#allocation7 + $0x30] sm:$0xf]
    %v272 = vld [vmem:[#allocation7 + $0x34] sm:$0xf]
    %v273 = vld [vmem:[#allocation7 + $0x38] sm:$0xf]
    %v274 = vld [vmem:[#allocation7 + $0x3c] sm:$0xf]
    %v275 = vld [vmem:[#allocation7 + $0x40] sm:$0xf]
    %v276 = vld [vmem:[#allocation7 + $0x44] sm:$0xf]
    %v277 = vld [vmem:[#allocation7 + $0x48] sm:$0xf]
    %v278 = vld [vmem:[#allocation7 + $0x4c] sm:$0xf]
    %v279 = vld [vmem:[#allocation7 + $0x50] sm:$0xf]
    %v280 = vld [vmem:[#allocation7 + $0x54] sm:$0xf]
    %v281 = vld [vmem:[#allocation7 + $0x58] sm:$0xf]
    %v282 = vld [vmem:[#allocation7 + $0x5c] sm:$0xf]
    %v283 = vld [vmem:[#allocation7 + $0x60] sm:$0xf]
    %v284 = vld [vmem:[#allocation7 + $0x64] sm:$0xf]
    %v285 = vld [vmem:[#allocation7 + $0x68] sm:$0xf]
    %v286 = vld [vmem:[#allocation7 + $0x6c] sm:$0xf]
    %v287 = vld [vmem:[#allocation7 + $0x70] sm:$0xf]
    %v288 = vld [vmem:[#allocation7 + $0x74] sm:$0xf]
    %v289 = vld [vmem:[#allocation7 + $0x78] sm:$0xf]
    %v290 = vld [vmem:[#allocation7 + $0x7c] sm:$0xf]
    %v292 = vlaneseq
    %v293 = vshrl.u32 %v292, 7
    %v294 = vsub.s32 0, %v293
    %v295 = vrot.slane %v78, %v294
    %v329 = vunpack.c.l.b16 %v259
    %v330 = vunpack.c.l.b16 %v260
    %v331 = vunpack.c.l.b16 %v261
    %v332 = vunpack.c.l.b16 %v262
    %v333 = vunpack.c.l.b16 %v263
    %v334 = vunpack.c.l.b16 %v264
    %v335 = vunpack.c.l.b16 %v265
    %v336 = vunpack.c.l.b16 %v266
    %v337 = vunpack.c.l.b16 %v267
    %v338 = vunpack.c.l.b16 %v268
    %v339 = vunpack.c.l.b16 %v269
    %v340 = vunpack.c.l.b16 %v270
    %v341 = vunpack.c.l.b16 %v271
    %v342 = vunpack.c.l.b16 %v272
    %v343 = vunpack.c.l.b16 %v273
    %v344 = vunpack.c.l.b16 %v274
    %v345 = vunpack.c.l.b16 %v275
    %v346 = vunpack.c.l.b16 %v276
    %v347 = vunpack.c.l.b16 %v277
    %v348 = vunpack.c.l.b16 %v278
    %v349 = vunpack.c.l.b16 %v279
    %v350 = vunpack.c.l.b16 %v280
    %v351 = vunpack.c.l.b16 %v281
    %v352 = vunpack.c.l.b16 %v282
    %v353 = vunpack.c.l.b16 %v283
    %v354 = vunpack.c.l.b16 %v284
    %v355 = vunpack.c.l.b16 %v285
    %v356 = vunpack.c.l.b16 %v286
    %v357 = vunpack.c.l.b16 %v287
    %v358 = vunpack.c.l.b16 %v288
    %v359 = vunpack.c.l.b16 %v289
    %v360 = vunpack.c.l.b16 %v290
    %v361 = vpack.c.b16 %v330, %v329
    %v362 = vpack.c.b16 %v332, %v331
    %v363 = vpack.c.b16 %v334, %v333
    %v364 = vpack.c.b16 %v336, %v335
    %v365 = vpack.c.b16 %v338, %v337
    %v366 = vpack.c.b16 %v340, %v339
    %v367 = vpack.c.b16 %v342, %v341
    %v368 = vpack.c.b16 %v344, %v343
    %v369 = vpack.c.b16 %v346, %v345
    %v370 = vpack.c.b16 %v348, %v347
    %v371 = vpack.c.b16 %v350, %v349
    %v372 = vpack.c.b16 %v352, %v351
    %v373 = vpack.c.b16 %v354, %v353
    %v374 = vpack.c.b16 %v356, %v355
    %v375 = vpack.c.b16 %v358, %v357
    %v376 = vpack.c.b16 %v360, %v359
    %393 = vmatprep.subr.bf16.mxu0 0
    %394 = vmatpush1.bf16.msra.mxu0 %v361
    %395 = vmatprep.subr.bf16.mxu0 0
    %396 = vmatpush1.bf16.msra.mxu0 %v362
    %397 = vmatprep.subr.bf16.mxu0 0
    %398 = vmatpush1.bf16.msra.mxu0 %v363
    %399 = vmatprep.subr.bf16.mxu0 0
    %400 = vmatpush1.bf16.msra.mxu0 %v364
    %401 = vmatprep.subr.bf16.mxu0 0
    %402 = vmatpush1.bf16.msra.mxu0 %v365
    %403 = vmatprep.subr.bf16.mxu0 0
    %404 = vmatpush1.bf16.msra.mxu0 %v366
    %405 = vmatprep.subr.bf16.mxu0 0
    %406 = vmatpush1.bf16.msra.mxu0 %v367
    %407 = vmatprep.subr.bf16.mxu0 0
    %408 = vmatpush1.bf16.msra.mxu0 %v368
    %409 = vmatprep.subr.bf16.mxu0 0
    %410 = vmatpush1.bf16.msra.mxu0 %v369
    %411 = vmatprep.subr.bf16.mxu0 0
    %412 = vmatpush1.bf16.msra.mxu0 %v370
    %413 = vmatprep.subr.bf16.mxu0 0
    %414 = vmatpush1.bf16.msra.mxu0 %v371
    %415 = vmatprep.subr.bf16.mxu0 0
    %416 = vmatpush1.bf16.msra.mxu0 %v372
    %417 = vmatprep.subr.bf16.mxu0 0
    %418 = vmatpush1.bf16.msra.mxu0 %v373
    %419 = vmatprep.subr.bf16.mxu0 0
    %420 = vmatpush1.bf16.msra.mxu0 %v374
    %421 = vmatprep.subr.bf16.mxu0 0
    %422 = vmatpush1.bf16.msra.mxu0 %v375
    %423 = vmatprep.subr.bf16.mxu0 0
    %424 = vmatpush1.bf16.msra.mxu0 %v376
    %425 = vmatprep.mubr.bf16.mxu0 %v256
    %426 = vmatmul.mubr.bf16.gmra.mrb[0].mxu0 %v255
    %v427 = vpop.f32.mrb[0].mxu0
    %v428 = vadd.f32 %v295, %v427
    %v429 = vpop.f32.mrb[0].mxu0
    %v430 = vpop.f32.mrb[0].mxu0
    %v431 = vadd.f32 %v295, %v430
    %v432 = vpop.f32.mrb[0].mxu0
    %433 = vmatprep.mubr.bf16.mxu0 %v258
    %434 = vmatmul.mubr.bf16.gmra.mrb[0].mxu0 %v257
    %v435 = vpop.f32.mrb[0].mxu0
    %v436 = vadd.f32 %v295, %v435
    %v437 = vpop.f32.mrb[0].mxu0
    %v438 = vpop.f32.mrb[0].mxu0
    %v439 = vadd.f32 %v295, %v438
    %v440 = vpop.f32.mrb[0].mxu0
    %441 = vdwg.mxu0
    %v442 = vmax.f32 %v428, 0.0
    %v443 = vmax.f32 %v431, 0.0
    %v444 = vmax.f32 %v436, 0.0
    %v445 = vmax.f32 %v439, 0.0
    %v446 = vpack.c.bf16 %v443, %v442
    %v447 = vpack.c.bf16 %v445, %v444
    %v448 = vld [vmem:[#allocation8] sm:$0xf]
    %v449 = vld [vmem:[#allocation8 + $0x8] sm:$0xf]
    %v450 = vld [vmem:[#allocation8 + $0x10] sm:$0xf]
    %v451 = vld [vmem:[#allocation8 + $0x18] sm:$0xf]
    %v452 = vld [vmem:[#allocation8 + $0x20] sm:$0xf]
    %v453 = vld [vmem:[#allocation8 + $0x28] sm:$0xf]
    %v454 = vld [vmem:[#allocation8 + $0x30] sm:$0xf]
    %v455 = vld [vmem:[#allocation8 + $0x38] sm:$0xf]
    %v456 = vld [vmem:[#allocation8 + $0x40] sm:$0xf]
    %v457 = vld [vmem:[#allocation8 + $0x48] sm:$0xf]
    %v458 = vld [vmem:[#allocation8 + $0x50] sm:$0xf]
    %v459 = vld [vmem:[#allocation8 + $0x58] sm:$0xf]
    %v460 = vld [vmem:[#allocation8 + $0x60] sm:$0xf]
    %v461 = vld [vmem:[#allocation8 + $0x68] sm:$0xf]
    %v462 = vld [vmem:[#allocation8 + $0x70] sm:$0xf]
    %v463 = vld [vmem:[#allocation8 + $0x78] sm:$0xf]
    %v465 = vlaneseq
    %v466 = vshrl.u32 %v465, 7
    %v467 = vsub.s32 0, %v466
    %v468 = vrot.slane %v79, %v467
    %v486 = vunpack.c.l.b16 %v448
    %v487 = vunpack.c.l.b16 %v449
    %v488 = vunpack.c.l.b16 %v450
    %v489 = vunpack.c.l.b16 %v451
    %v490 = vunpack.c.l.b16 %v452
    %v491 = vunpack.c.l.b16 %v453
    %v492 = vunpack.c.l.b16 %v454
    %v493 = vunpack.c.l.b16 %v455
    %v494 = vunpack.c.l.b16 %v456
    %v495 = vunpack.c.l.b16 %v457
    %v496 = vunpack.c.l.b16 %v458
    %v497 = vunpack.c.l.b16 %v459
    %v498 = vunpack.c.l.b16 %v460
    %v499 = vunpack.c.l.b16 %v461
    %v500 = vunpack.c.l.b16 %v462
    %v501 = vunpack.c.l.b16 %v463
    %v502 = vpack.c.b16 %v487, %v486
    %v503 = vpack.c.b16 %v489, %v488
    %v504 = vpack.c.b16 %v491, %v490
    %v505 = vpack.c.b16 %v493, %v492
    %v506 = vpack.c.b16 %v495, %v494
    %v507 = vpack.c.b16 %v497, %v496
    %v508 = vpack.c.b16 %v499, %v498
    %v509 = vpack.c.b16 %v501, %v500
    %518 = vmatprep.subr.bf16.mxu0 0
    %519 = vmatpush1.bf16.msra.mxu0 %v502
    %520 = vmatprep.subr.bf16.mxu0 0
    %521 = vmatpush1.bf16.msra.mxu0 %v503
    %522 = vmatprep.subr.bf16.mxu0 0
    %523 = vmatpush1.bf16.msra.mxu0 %v504
    %524 = vmatprep.subr.bf16.mxu0 0
    %525 = vmatpush1.bf16.msra.mxu0 %v505
    %526 = vmatprep.subr.bf16.mxu0 0
    %527 = vmatpush1.bf16.msra.mxu0 %v506
    %528 = vmatprep.subr.bf16.mxu0 0
    %529 = vmatpush1.bf16.msra.mxu0 %v507
    %530 = vmatprep.subr.bf16.mxu0 0
    %531 = vmatpush1.bf16.msra.mxu0 %v508
    %532 = vmatprep.subr.bf16.mxu0 0
    %533 = vmatpush1.bf16.msra.mxu0 %v509
    %534 = vmatprep.subr.bf16.mxu0 0
    %535 = vmatpush1.bf16.msra.mxu0 0
    %536 = vmatprep.subr.bf16.mxu0 0
    %537 = vmatpush1.bf16.msra.mxu0 0
    %538 = vmatprep.subr.bf16.mxu0 0
    %539 = vmatpush1.bf16.msra.mxu0 0
    %540 = vmatprep.subr.bf16.mxu0 0
    %541 = vmatpush1.bf16.msra.mxu0 0
    %542 = vmatprep.subr.bf16.mxu0 0
    %543 = vmatpush1.bf16.msra.mxu0 0
    %544 = vmatprep.subr.bf16.mxu0 0
    %545 = vmatpush1.bf16.msra.mxu0 0
    %546 = vmatprep.subr.bf16.mxu0 0
    %547 = vmatpush1.bf16.msra.mxu0 0
    %548 = vmatprep.subr.bf16.mxu0 0
    %549 = vmatpush1.bf16.msra.mxu0 0
    %550 = vmatprep.mubr.bf16.mxu0 0
    %551 = vmatmul.mubr.bf16.gmra.mrb[0].mxu0 %v446
    %v552 = vpop.f32.mrb[0].mxu0
    %v553 = vadd.f32 %v468, %v552
    %v554 = vpop.f32.mrb[0].mxu0
    %v555 = vpop.f32.mrb[0].mxu0
    %v556 = vadd.f32 %v468, %v555
    %v557 = vpop.f32.mrb[0].mxu0
    %558 = vmatprep.mubr.bf16.mxu0 0
    %559 = vmatmul.mubr.bf16.gmra.mrb[0].mxu0 %v447
    %v560 = vpop.f32.mrb[0].mxu0
    %v561 = vadd.f32 %v468, %v560
    %v562 = vpop.f32.mrb[0].mxu0
    %v563 = vpop.f32.mrb[0].mxu0
    %v564 = vadd.f32 %v468, %v563
    %v565 = vpop.f32.mrb[0].mxu0
    %566 = vdwg.mxu0
    %v567 = vmax.f32 %v553, 0.0
    %v568 = vmax.f32 %v556, 0.0
    %v569 = vmax.f32 %v561, 0.0
    %v570 = vmax.f32 %v564, 0.0
    %v571 = vpack.c.bf16 %v568, %v567
    %v572 = vpack.c.bf16 %v570, %v569
    %v573 = vld [vmem:[#allocation8 + $0x4] sm:$0xf]
    %v574 = vld [vmem:[#allocation8 + $0xc] sm:$0xf]
    %v575 = vld [vmem:[#allocation8 + $0x14] sm:$0xf]
    %v576 = vld [vmem:[#allocation8 + $0x1c] sm:$0xf]
    %v577 = vld [vmem:[#allocation8 + $0x24] sm:$0xf]
    %v578 = vld [vmem:[#allocation8 + $0x2c] sm:$0xf]
    %v579 = vld [vmem:[#allocation8 + $0x34] sm:$0xf]
    %v580 = vld [vmem:[#allocation8 + $0x3c] sm:$0xf]
    %v581 = vld [vmem:[#allocation8 + $0x44] sm:$0xf]
    %v582 = vld [vmem:[#allocation8 + $0x4c] sm:$0xf]
    %v583 = vld [vmem:[#allocation8 + $0x54] sm:$0xf]
    %v584 = vld [vmem:[#allocation8 + $0x5c] sm:$0xf]
    %v585 = vld [vmem:[#allocation8 + $0x64] sm:$0xf]
    %v586 = vld [vmem:[#allocation8 + $0x6c] sm:$0xf]
    %v587 = vld [vmem:[#allocation8 + $0x74] sm:$0xf]
    %v588 = vld [vmem:[#allocation8 + $0x7c] sm:$0xf]
    %v590 = vlaneseq
    %v591 = vshrl.u32 %v590, 7
    %v592 = vsub.s32 0, %v591
    %v593 = vrot.slane %v80, %v592
    %v611 = vunpack.c.l.b16 %v573
    %v612 = vunpack.c.l.b16 %v574
    %v613 = vunpack.c.l.b16 %v575
    %v614 = vunpack.c.l.b16 %v576
    %v615 = vunpack.c.l.b16 %v577
    %v616 = vunpack.c.l.b16 %v578
    %v617 = vunpack.c.l.b16 %v579
    %v618 = vunpack.c.l.b16 %v580
    %v619 = vunpack.c.l.b16 %v581
    %v620 = vunpack.c.l.b16 %v582
    %v621 = vunpack.c.l.b16 %v583
    %v622 = vunpack.c.l.b16 %v584
    %v623 = vunpack.c.l.b16 %v585
    %v624 = vunpack.c.l.b16 %v586
    %v625 = vunpack.c.l.b16 %v587
    %v626 = vunpack.c.l.b16 %v588
    %v627 = vpack.c.b16 %v612, %v611
    %v628 = vpack.c.b16 %v614, %v613
    %v629 = vpack.c.b16 %v616, %v615
    %v630 = vpack.c.b16 %v618, %v617
    %v631 = vpack.c.b16 %v620, %v619
    %v632 = vpack.c.b16 %v622, %v621
    %v633 = vpack.c.b16 %v624, %v623
    %v634 = vpack.c.b16 %v626, %v625
    %643 = vmatprep.subr.bf16.mxu0 0
    %644 = vmatpush1.bf16.msra.mxu0 %v627
    %645 = vmatprep.subr.bf16.mxu0 0
    %646 = vmatpush1.bf16.msra.mxu0 %v628
    %647 = vmatprep.subr.bf16.mxu0 0
    %648 = vmatpush1.bf16.msra.mxu0 %v629
    %649 = vmatprep.subr.bf16.mxu0 0
    %650 = vmatpush1.bf16.msra.mxu0 %v630
    %651 = vmatprep.subr.bf16.mxu0 0
    %652 = vmatpush1.bf16.msra.mxu0 %v631
    %653 = vmatprep.subr.bf16.mxu0 0
    %654 = vmatpush1.bf16.msra.mxu0 %v632
    %655 = vmatprep.subr.bf16.mxu0 0
    %656 = vmatpush1.bf16.msra.mxu0 %v633
    %657 = vmatprep.subr.bf16.mxu0 0
    %658 = vmatpush1.bf16.msra.mxu0 %v634
    %659 = vmatprep.subr.bf16.mxu0 0
    %660 = vmatpush1.bf16.msra.mxu0 0
    %661 = vmatprep.subr.bf16.mxu0 0
    %662 = vmatpush1.bf16.msra.mxu0 0
    %663 = vmatprep.subr.bf16.mxu0 0
    %664 = vmatpush1.bf16.msra.mxu0 0
    %665 = vmatprep.subr.bf16.mxu0 0
    %666 = vmatpush1.bf16.msra.mxu0 0
    %667 = vmatprep.subr.bf16.mxu0 0
    %668 = vmatpush1.bf16.msra.mxu0 0
    %669 = vmatprep.subr.bf16.mxu0 0
    %670 = vmatpush1.bf16.msra.mxu0 0
    %671 = vmatprep.subr.bf16.mxu0 0
    %672 = vmatpush1.bf16.msra.mxu0 0
    %673 = vmatprep.subr.bf16.mxu0 0
    %674 = vmatpush1.bf16.msra.mxu0 0
    %675 = vmatprep.mubr.bf16.mxu0 0
    %676 = vmatmul.mubr.bf16.gmra.mrb[0].mxu0 %v571
    %v677 = vpop.f32.mrb[0].mxu0
    %v678 = vadd.f32 %v593, %v677
    %v679 = vpop.f32.mrb[0].mxu0
    %v680 = vpop.f32.mrb[0].mxu0
    %v681 = vadd.f32 %v593, %v680
    %v682 = vpop.f32.mrb[0].mxu0
    %683 = vmatprep.mubr.bf16.mxu0 0
    %684 = vmatmul.mubr.bf16.gmra.mrb[0].mxu0 %v572
    %v685 = vpop.f32.mrb[0].mxu0
    %v686 = vadd.f32 %v593, %v685
    %v687 = vpop.f32.mrb[0].mxu0
    %v688 = vpop.f32.mrb[0].mxu0
    %v689 = vadd.f32 %v593, %v688
    %v690 = vpop.f32.mrb[0].mxu0
    %691 = vdwg.mxu0
    %692 = vst [vmem:[#allocation10] sm:$0xff] %v678
    %693 = vst [vmem:[#allocation10 + $0x8] sm:$0xff] %v681
    %694 = vst [vmem:[#allocation10 + $0x10] sm:$0xff] %v686
    %695 = vst [vmem:[#allocation10 + $0x18] sm:$0xff] %v689
    // Predicated region
    $region38: #{tpu_custom_call.1} parent=1 // pred_check
      _
    $region39: #{tpu_custom_call.1} parent=1 // pred_check_branch
      %697 = sbr.rel (0) target = $region41
    $region40: #{tpu_custom_call.1} parent=1 // pred_region
      %s699 = ssub.s32 512, 512
      %700 = vsyncadd [#allocation4], %s699
      %s701 = sshll.u32 [#allocation10], 4
      %s702 = int_to_ptr.vmem [resolvable:$true] %s701
      %707 = dma.vmem_to_hbm [thread:$0]  %s702, 512, %s5, [#allocation4], 128, 128, 8
    $region41: #{tpu_custom_call.1} parent=1 // pred_fallthru
      _
    // Predicated region
    $region42: #{tpu_custom_call.1} parent=1 // pred_check
      _
    $region43: #{tpu_custom_call.1} parent=1 // pred_check_branch
      %709 = sbr.rel (0) target = $region45
    $region44: #{tpu_custom_call.1} parent=1 // pred_region
      %710 = dma.done [#allocation4], 512
    $region45: #{tpu_custom_call.1} parent=1 // pred_fallthru
      _
    %711 = vsyncpa [#allocation3], 1
    %712 = vsyncpa [#allocation6], 1
    %713 = vsyncpa [#allocation9], 1
    %714 = vsyncpa [#allocation4], 1

</llo_original>
